<compile_context>
chip_gen: v5e
topology: v5e:2x2
jax: 0.10.0
libtpu: 0.0.40
codegen_flags: <defaults>
</compile_context>

<pallas_src>
import jax
import jax.numpy as jnp
from jax.experimental import pallas as pl
from jax.experimental.pallas import tpu as pltpu


def _round_up(x, m):
    return ((x + m - 1) // m) * m


def _fuse_and_pad_params(params, obs_dim):
    """Fuse actor/critic into 3 lane-padded bf16 weight matrices + 3 f32 bias rows.

    Output-head columns are placed at lane offset `state_dim` so the kernel can
    assemble the [state | logits | value] slab with a single add (state's padding
    lanes and the head's first state_dim lanes are zero by construction).
    """
    w_rep, b_rep = params["w_rep"], params["b_rep"]
    w_a1, b_a1 = params["w_a1"], params["b_a1"]
    w_a2, b_a2 = params["w_a2"], params["b_a2"]
    w_c1, b_c1 = params["w_c1"], params["b_c1"]
    w_c2, b_c2 = params["w_c2"], params["b_c2"]

    state_dim = w_rep.shape[1]
    act_h = w_a1.shape[1]
    crit_h = w_c1.shape[1]
    action_dim = w_a2.shape[1]
    h2 = act_h + crit_h

    # One lane-dense slab wide enough for state + logits + value.
    slab = _round_up(state_dim + action_dim + 1, 128)
    h2_pad = _round_up(h2, 128)

    f32, bf16 = jnp.float32, jnp.bfloat16

    # representation: obs (natural width) -> state slab
    wr = jnp.zeros((obs_dim, slab), f32).at[:, :state_dim].set(w_rep).astype(bf16)
    br = jnp.zeros((1, slab), f32).at[:, :state_dim].set(b_rep)

    # fused actor/critic hidden: slab -> h2_pad
    wh = jnp.zeros((slab, h2_pad), f32)
    wh = wh.at[:state_dim, :act_h].set(w_a1)
    wh = wh.at[:state_dim, act_h:h2].set(w_c1)
    wh = wh.astype(bf16)
    bh = jnp.zeros((1, h2_pad), f32).at[:, :act_h].set(b_a1).at[:, act_h:h2].set(b_c1)

    # fused block-diagonal head: h2_pad -> slab, columns offset past state_dim
    wo = jnp.zeros((h2_pad, slab), f32)
    wo = wo.at[:act_h, state_dim:state_dim + action_dim].set(w_a2)
    wo = wo.at[act_h:h2, state_dim + action_dim].set(w_c2[:, 0])
    wo = wo.astype(bf16)
    bo = jnp.zeros((1, slab), f32)
    bo = bo.at[:, state_dim:state_dim + action_dim].set(b_a2)
    bo = bo.at[:, state_dim + action_dim].set(b_c2[0, 0])

    dims = dict(obs_dim=obs_dim, state_dim=state_dim, action_dim=action_dim,
                slab=slab, h2_pad=h2_pad)
    return (wr, wh, wo, br, bh, bo), dims


def actor_critic_forward(obs, params, *, tile_b=512):
    """Fused representation/actor/critic forward.

    obs: (B, obs_dim) float32
    Returns (outputs_dict, logits, value) matching the PyTorch module:
      outputs_dict = {'state': (B, state_dim)}, logits (B, action_dim), value (B,)
    """
    assert tile_b % 8 == 0
    obs = obs.astype(jnp.float32)
    B, obs_dim = obs.shape
    (wr, wh, wo, br, bh, bo), d = _fuse_and_pad_params(params, obs_dim)
    slab, h2_pad = d["slab"], d["h2_pad"]
    state_dim, action_dim = d["state_dim"], d["action_dim"]

    # Batch tiling: small batches run in one tile with no padding; large batches
    # get >= 2 grid steps so the "parallel" axis can shard across v7x's 2 cores.
    B_pad = _round_up(B, 8)
    if B_pad <= tile_b:
        if B_pad >= 256:
            tile_b = _round_up((B_pad + 1) // 2, 8)
            B_pad = _round_up(B_pad, tile_b)
        else:
            tile_b = B_pad
    else:
        B_pad = _round_up(B, tile_b)
    grid = (B_pad // tile_b,)

    # Only pad the batch axis, and only when actually ragged (no lane padding).
    obs_p = obs if B_pad == B else jnp.pad(obs, ((0, B_pad - B), (0, 0)))

    def kernel(x_ref, wr_ref, wh_ref, wo_ref, br_ref, bh_ref, bo_ref, out_ref):
        bf16 = jnp.bfloat16
        x = x_ref[...]  # f32 (tile_b, obs_dim)
        # representation: bf16 MXU operands, f32 accumulate, f32 bias+ReLU
        state = jnp.maximum(
            jnp.dot(x.astype(bf16), wr_ref[...],
                    preferred_element_type=jnp.float32) + br_ref[...], 0.0)
        # fused actor+critic hidden layer
        hidden = jnp.maximum(
            jnp.dot(state.astype(bf16), wh_ref[...],
                    preferred_element_type=jnp.float32) + bh_ref[...], 0.0)
        # fused block-diagonal head (columns pre-offset past state_dim)
        head = jnp.dot(hidden.astype(bf16), wo_ref[...],
                       preferred_element_type=jnp.float32) + bo_ref[...]
        # state's padding lanes and head's first state_dim lanes are zero, so one
        # add assembles [state | logits | value | 0-pad]; single unmasked store.
        out_ref[...] = (state + head).astype(out_ref.dtype)

    # Roofline / scheduler hints.
    flops = 2 * B_pad * (obs_dim * slab + slab * h2_pad + h2_pad * slab)
    bytes_accessed = (4 * B_pad * obs_dim                                   # obs in (f32)
                      + 2 * (obs_dim * slab + slab * h2_pad + h2_pad * slab)  # weights (bf16)
                      + 4 * (2 * slab + h2_pad)                             # biases (f32)
                      + 4 * B_pad * slab)                                   # out slab (f32)

    # VMEM budget from actual tile sizes (double buffers + weights + intermediates).
    vmem_est = (2 * tile_b * obs_dim * 4
                + 2 * tile_b * slab * 4
                + 2 * 2 * (obs_dim * slab + slab * h2_pad + h2_pad * slab)
                + 2 * 4 * (2 * slab + h2_pad)
                + 4 * tile_b * (2 * slab + h2_pad))
    vmem_limit = int(min(max(2 * vmem_est, 8 * 1024 * 1024), 48 * 1024 * 1024))

    out = pl.pallas_call(
        kernel,
        out_shape=jax.ShapeDtypeStruct((B_pad, slab), jnp.float32),
        grid_spec=pltpu.PrefetchScalarGridSpec(
            num_scalar_prefetch=0,
            grid=grid,
            in_specs=[
                pl.BlockSpec((tile_b, obs_dim), lambda i: (i, 0)),
                pl.BlockSpec(wr.shape, lambda i: (0, 0)),
                pl.BlockSpec(wh.shape, lambda i: (0, 0)),
                pl.BlockSpec(wo.shape, lambda i: (0, 0)),
                pl.BlockSpec(br.shape, lambda i: (0, 0)),
                pl.BlockSpec(bh.shape, lambda i: (0, 0)),
                pl.BlockSpec(bo.shape, lambda i: (0, 0)),
            ],
            out_specs=pl.BlockSpec((tile_b, slab), lambda i: (i, 0)),
        ),
        compiler_params=pltpu.CompilerParams(
            dimension_semantics=("parallel",),
            vmem_limit_bytes=vmem_limit,
        ),
        cost_estimate=pl.CostEstimate(
            flops=int(flops), transcendentals=0, bytes_accessed=int(bytes_accessed)),
    )(obs_p, wr, wh, wo, br, bh, bo)

    state = out[:B, :state_dim]
    logits = out[:B, state_dim:state_dim + action_dim]
    value = out[:B, state_dim + action_dim]
    outputs = {"state": state}
    return outputs, logits, value  # (outputs, a_dist logits, value[:, 0])


def init_params(key, obs_dim, state_dim, actor_hidden, critic_hidden, action_dim):
    """Deterministic synthetic parameter init (shapes follow the module __init__)."""
    ks = jax.random.split(key, 10)
    scale = 0.1

    def lin(k, fan_in, fan_out):
        return scale * jax.random.normal(k, (fan_in, fan_out), dtype=jnp.float32)

    return {
        "w_rep": lin(ks[0], obs_dim, state_dim),
        "b_rep": scale * jax.random.normal(ks[1], (1, state_dim), dtype=jnp.float32),
        "w_a1": lin(ks[2], state_dim, actor_hidden),
        "b_a1": scale * jax.random.normal(ks[3], (1, actor_hidden), dtype=jnp.float32),
        "w_a2": lin(ks[4], actor_hidden, action_dim),
        "b_a2": scale * jax.random.normal(ks[5], (1, action_dim), dtype=jnp.float32),
        "w_c1": lin(ks[6], state_dim, critic_hidden),
        "b_c1": scale * jax.random.normal(ks[7], (1, critic_hidden), dtype=jnp.float32),
        "w_c2": lin(ks[8], critic_hidden, 1),
        "b_c2": scale * jax.random.normal(ks[9], (1, 1), dtype=jnp.float32),
    }


def _reference_forward(obs, p):
    """Plain-JAX f32 reference for correctness checking."""
    state = jnp.maximum(obs @ p["w_rep"] + p["b_rep"], 0.0)
    ah = jnp.maximum(state @ p["w_a1"] + p["b_a1"], 0.0)
    logits = ah @ p["w_a2"] + p["b_a2"]
    ch = jnp.maximum(state @ p["w_c1"] + p["b_c1"], 0.0)
    value = ch @ p["w_c2"] + p["b_c2"]
    return state, logits, value[:, 0]


def _check(obs, params, atol=2e-2, rtol=2e-2):
    # Tolerances account for the intentional bf16 quantization of MXU operands
    # (weights/activations), with f32 accumulation; the f32 reference mirrors the
    # original PyTorch module exactly.
    outputs, logits, value = actor_critic_forward(obs, params)
    jax.block_until_ready((outputs["state"], logits, value))
    r_s, r_l, r_v = _reference_forward(obs, params)
    assert outputs["state"].shape == r_s.shape
    assert logits.shape == r_l.shape
    assert value.shape == r_v.shape
    assert jnp.allclose(outputs["state"], r_s, atol=atol, rtol=rtol)
    assert jnp.allclose(logits, r_l, atol=atol, rtol=rtol)
    assert jnp.allclose(value, r_v, atol=atol, rtol=rtol)


if __name__ == "__main__":
    key = jax.random.PRNGKey(0)
    k_obs, k_par = jax.random.split(key)

    # Small shapes consistent with the module's forward: vector observations.
    B, OBS_DIM = 8, 16
    STATE_DIM, ACTOR_H, CRITIC_H, ACTION_DIM = 32, 32, 32, 4

    obs = jax.random.normal(k_obs, (B, OBS_DIM), dtype=jnp.float32)
    params = init_params(k_par, OBS_DIM, STATE_DIM, ACTOR_H, CRITIC_H, ACTION_DIM)
    _check(obs, params)

    # Ragged batch (not a multiple of 8) exercises the batch pad-and-slice path.
    obs2 = jax.random.normal(jax.random.PRNGKey(1), (6, OBS_DIM), dtype=jnp.float32)
    _check(obs2, params)

    # Larger batch exercises the >=2-grid-step (dual TensorCore) path.
    obs3 = jax.random.normal(jax.random.PRNGKey(2), (300, OBS_DIM), dtype=jnp.float32)
    _check(obs3, params)

    print("KERNEL_OK")
</pallas_src>

<mosaic_0001>
module attributes {stable_mosaic.version = 11 : i64} {
  func.func @kernel(%arg0: i32, %arg1: memref<8x16xf32, #tpu.memory_space<vmem>>, %arg2: memref<16x128xbf16, #tpu.memory_space<vmem>>, %arg3: memref<128x128xbf16, #tpu.memory_space<vmem>>, %arg4: memref<128x128xbf16, #tpu.memory_space<vmem>>, %arg5: memref<1x128xf32, #tpu.memory_space<vmem>>, %arg6: memref<1x128xf32, #tpu.memory_space<vmem>>, %arg7: memref<1x128xf32, #tpu.memory_space<vmem>>, %arg8: memref<8x128xf32, #tpu.memory_space<vmem>>) attributes {dimension_semantics = [#tpu.dimension_semantics<parallel>], iteration_bounds = array<i64: 1>, scalar_prefetch = 0 : i64, scratch_operands = 0 : i64, tpu.core_type = #tpu.core_type<tc>, window_params = [{transform_indices = @transform_0, window_bounds = array<i64: 8, 16>}, {pipeline_mode = #tpu.pipeline_mode<synchronous>, transform_indices = @transform_1, window_bounds = array<i64: 16, 128>}, {pipeline_mode = #tpu.pipeline_mode<synchronous>, transform_indices = @transform_2, window_bounds = array<i64: 128, 128>}, {pipeline_mode = #tpu.pipeline_mode<synchronous>, transform_indices = @transform_3, window_bounds = array<i64: 128, 128>}, {pipeline_mode = #tpu.pipeline_mode<synchronous>, transform_indices = @transform_4, window_bounds = array<i64: 1, 128>}, {pipeline_mode = #tpu.pipeline_mode<synchronous>, transform_indices = @transform_5, window_bounds = array<i64: 1, 128>}, {pipeline_mode = #tpu.pipeline_mode<synchronous>, transform_indices = @transform_6, window_bounds = array<i64: 1, 128>}, {transform_indices = @transform_7, window_bounds = array<i64: 8, 128>}]} {
    %c0 = arith.constant 0 : index
    %c0_0 = arith.constant 0 : index
    %0 = vector.load %arg1[%c0, %c0_0] : memref<8x16xf32, #tpu.memory_space<vmem>>, vector<8x16xf32>
    %1 = arith.truncf %0 : vector<8x16xf32> to vector<8x16xbf16>
    %c0_1 = arith.constant 0 : index
    %c0_2 = arith.constant 0 : index
    %2 = vector.load %arg2[%c0_1, %c0_2] : memref<16x128xbf16, #tpu.memory_space<vmem>>, vector<16x128xbf16>
    %cst = arith.constant dense<0.000000e+00> : vector<8x128xf32>
    %3 = tpu.matmul %1, %2, %cst {dimension_numbers = #tpu.dot_dimension_numbers<[1], [0], [0], [1], [0, 0, 1, 1], [], []>} : vector<8x16xbf16>, vector<16x128xbf16>, vector<8x128xf32> -> vector<8x128xf32>
    %c0_3 = arith.constant 0 : index
    %c0_4 = arith.constant 0 : index
    %4 = vector.load %arg5[%c0_3, %c0_4] : memref<1x128xf32, #tpu.memory_space<vmem>>, vector<1x128xf32>
    %5 = vector.broadcast %4 : vector<1x128xf32> to vector<8x128xf32>
    %6 = arith.addf %3, %5 : vector<8x128xf32>
    %cst_5 = arith.constant 0.000000e+00 : f32
    %7 = vector.broadcast %cst_5 : f32 to vector<8x128xf32>
    %8 = arith.maximumf %6, %7 : vector<8x128xf32>
    %9 = arith.truncf %8 : vector<8x128xf32> to vector<8x128xbf16>
    %c0_6 = arith.constant 0 : index
    %c0_7 = arith.constant 0 : index
    %10 = vector.load %arg3[%c0_6, %c0_7] : memref<128x128xbf16, #tpu.memory_space<vmem>>, vector<128x128xbf16>
    %cst_8 = arith.constant dense<0.000000e+00> : vector<8x128xf32>
    %11 = tpu.matmul %9, %10, %cst_8 {dimension_numbers = #tpu.dot_dimension_numbers<[1], [0], [0], [1], [0, 0, 1, 1], [], []>} : vector<8x128xbf16>, vector<128x128xbf16>, vector<8x128xf32> -> vector<8x128xf32>
    %c0_9 = arith.constant 0 : index
    %c0_10 = arith.constant 0 : index
    %12 = vector.load %arg6[%c0_9, %c0_10] : memref<1x128xf32, #tpu.memory_space<vmem>>, vector<1x128xf32>
    %13 = vector.broadcast %12 : vector<1x128xf32> to vector<8x128xf32>
    %14 = arith.addf %11, %13 : vector<8x128xf32>
    %cst_11 = arith.constant 0.000000e+00 : f32
    %15 = vector.broadcast %cst_11 : f32 to vector<8x128xf32>
    %16 = arith.maximumf %14, %15 : vector<8x128xf32>
    %17 = arith.truncf %16 : vector<8x128xf32> to vector<8x128xbf16>
    %c0_12 = arith.constant 0 : index
    %c0_13 = arith.constant 0 : index
    %18 = vector.load %arg4[%c0_12, %c0_13] : memref<128x128xbf16, #tpu.memory_space<vmem>>, vector<128x128xbf16>
    %cst_14 = arith.constant dense<0.000000e+00> : vector<8x128xf32>
    %19 = tpu.matmul %17, %18, %cst_14 {dimension_numbers = #tpu.dot_dimension_numbers<[1], [0], [0], [1], [0, 0, 1, 1], [], []>} : vector<8x128xbf16>, vector<128x128xbf16>, vector<8x128xf32> -> vector<8x128xf32>
    %c0_15 = arith.constant 0 : index
    %c0_16 = arith.constant 0 : index
    %20 = vector.load %arg7[%c0_15, %c0_16] : memref<1x128xf32, #tpu.memory_space<vmem>>, vector<1x128xf32>
    %21 = vector.broadcast %20 : vector<1x128xf32> to vector<8x128xf32>
    %22 = arith.addf %19, %21 : vector<8x128xf32>
    %23 = arith.addf %8, %22 : vector<8x128xf32>
    %c0_17 = arith.constant 0 : index
    %c0_18 = arith.constant 0 : index
    %24 = vector.load %arg8[%c0_17, %c0_18] : memref<8x128xf32, #tpu.memory_space<vmem>>, vector<8x128xf32>
    tpu.vector_store %arg8[%c0_17, %c0_18], %23 {strides = array<i32>} : memref<8x128xf32, #tpu.memory_space<vmem>>, vector<8x128xf32>,
    return
  }
  func.func @transform_0(%arg0: i32) -> (i32, i32) {
    %c0_i32 = arith.constant 0 : i32
    %c0_i32_0 = arith.constant 0 : i32
    return %arg0, %c0_i32 : i32, i32
  }
  func.func @transform_1(%arg0: i32) -> (i32, i32) {
    %c0_i32 = arith.constant 0 : i32
    %c0_i32_0 = arith.constant 0 : i32
    %c0_i32_1 = arith.constant 0 : i32
    return %c0_i32, %c0_i32_0 : i32, i32
  }
  func.func @transform_2(%arg0: i32) -> (i32, i32) {
    %c0_i32 = arith.constant 0 : i32
    %c0_i32_0 = arith.constant 0 : i32
    %c0_i32_1 = arith.constant 0 : i32
    return %c0_i32, %c0_i32_0 : i32, i32
  }
  func.func @transform_3(%arg0: i32) -> (i32, i32) {
    %c0_i32 = arith.constant 0 : i32
    %c0_i32_0 = arith.constant 0 : i32
    %c0_i32_1 = arith.constant 0 : i32
    return %c0_i32, %c0_i32_0 : i32, i32
  }
  func.func @transform_4(%arg0: i32) -> (i32, i32) {
    %c0_i32 = arith.constant 0 : i32
    %c0_i32_0 = arith.constant 0 : i32
    %c0_i32_1 = arith.constant 0 : i32
    return %c0_i32, %c0_i32_0 : i32, i32
  }
  func.func @transform_5(%arg0: i32) -> (i32, i32) {
    %c0_i32 = arith.constant 0 : i32
    %c0_i32_0 = arith.constant 0 : i32
    %c0_i32_1 = arith.constant 0 : i32
    return %c0_i32, %c0_i32_0 : i32, i32
  }
  func.func @transform_6(%arg0: i32) -> (i32, i32) {
    %c0_i32 = arith.constant 0 : i32
    %c0_i32_0 = arith.constant 0 : i32
    %c0_i32_1 = arith.constant 0 : i32
    return %c0_i32, %c0_i32_0 : i32, i32
  }
  func.func @transform_7(%arg0: i32) -> (i32, i32) {
    %c0_i32 = arith.constant 0 : i32
    %c0_i32_0 = arith.constant 0 : i32
    return %arg0, %c0_i32 : i32, i32
  }
}

</mosaic_0001>

<llo_original>
// kernel: tpu_custom_call.1
$region0: #{tpu_custom_call.1}
  #allocation0 [shape = 'u32[]', space=smem, size = 0x4, offset = 0x4, fixed_abs, tag = 'smem constant byte address 0x4 - core index']
  #allocation1 [shape = 'u32[72,128]{1,0:T(1,128)}', space=vmem, size = 0x9000, scoped, tag = 'internal scratch']
  %s0 = inlined_call_operand.hbm [shape: f32[8,16], index: 0, kind: input, shape index: {}]
  %s1 = inlined_call_operand.hbm [shape: bf16[16,128], index: 1, kind: input, shape index: {}]
  %s2 = inlined_call_operand.hbm [shape: bf16[128,128], index: 2, kind: input, shape index: {}]
  %s3 = inlined_call_operand.hbm [shape: bf16[128,128], index: 3, kind: input, shape index: {}]
  %s4 = inlined_call_operand.vmem [shape: f32[1,128], index: 4, kind: input, shape index: {}]
  %s5 = inlined_call_operand.vmem [shape: f32[1,128], index: 5, kind: input, shape index: {}]
  %s6 = inlined_call_operand.vmem [shape: f32[1,128], index: 6, kind: input, shape index: {}]
  %s7 = inlined_call_operand.hbm [shape: f32[8,128], index: 7, kind: output, shape index: {}]
  %s8 = sld [smem:[#allocation0]]
  $region54: #{tpu_custom_call.1} parent=0
    _
  %s10 = ssub.s32 1, %s8
  %s11 = scalar_select 0, %s10, %s8
  $region1: #{tpu_custom_call.1} parent=0
    #allocation2 [shape = 'u8[4096]{0}', space=vmem, size = 0x1000, scoped, tag = 'input window, operand 0, single buffered']
    #allocation3 [shape = 's32[1]{0}', space=sflag, size = 0x4, scoped, tag = 'scoped memory for tpu_custom_call.1']
    #allocation4 [shape = 's32[1]{0}', space=sflag, size = 0x4, scoped, tag = 'scoped memory for tpu_custom_call.1']
    #allocation5 [shape = 'u8[4096]{0}', space=vmem, size = 0x1000, scoped, tag = 'input window, operand 1, single buffered']
    #allocation6 [shape = 's32[1]{0}', space=sflag, size = 0x4, scoped, tag = 'scoped memory for tpu_custom_call.1']
    #allocation7 [shape = 'u8[32768]{0}', space=vmem, size = 0x8000, scoped, tag = 'input window, operand 2, single buffered']
    #allocation8 [shape = 'u8[32768]{0}', space=vmem, size = 0x8000, scoped, tag = 'input window, operand 3, single buffered']
    #allocation9 [shape = 's32[1]{0}', space=sflag, size = 0x4, scoped, tag = 'scoped memory for tpu_custom_call.1']
    #allocation10 [shape = 'u8[4096]{0}', space=vmem, size = 0x1000, scoped, tag = 'output window, operand 0, single buffered']
    %12 = vsyncpa [#allocation3], 0
    %13 = vsyncpa [#allocation6], 0
    %14 = vsyncpa [#allocation9], 0
    %15 = vsyncpa [#allocation4], 0
    // Predicated region
    $region2: #{tpu_custom_call.1} parent=1 // pred_check
      _
    $region3: #{tpu_custom_call.1} parent=1 // pred_check_branch
      %17 = sbr.rel (0) target = $region5
    $region4: #{tpu_custom_call.1} parent=1 // pred_region
      %19 = vsyncadd [#allocation3], 0
      %s21 = sshll.u32 %s0, 4
      %s22 = int_to_ptr.hbm [resolvable:$true] %s21
      %s23 = sshll.u32 [#allocation2], 4
      %s24 = int_to_ptr.vmem [resolvable:$true] %s23
      %26 = dma.hbm_to_vmem [thread:$0]  %s22, 128, %s24, [#allocation3]
    $region5: #{tpu_custom_call.1} parent=1 // pred_fallthru
      _
    // Predicated region
    $region6: #{tpu_custom_call.1} parent=1 // pred_check
      _
    $region7: #{tpu_custom_call.1} parent=1 // pred_check_branch
      %28 = sbr.rel (0) target = $region9
    $region8: #{tpu_custom_call.1} parent=1 // pred_region
      %30 = vsyncadd [#allocation6], 0
      %s31 = sshll.u32 %s1, 4
      %s32 = int_to_ptr.hbm [resolvable:$true] %s31
      %s33 = sshll.u32 [#allocation5], 4
      %s34 = int_to_ptr.vmem [resolvable:$true] %s33
      %39 = dma.hbm_to_vmem [thread:$0]  %s32, 128, %s34, [#allocation6], 64, 64, 4
    $region9: #{tpu_custom_call.1} parent=1 // pred_fallthru
      _
    // Predicated region
    $region10: #{tpu_custom_call.1} parent=1 // pred_check
      _
    $region11: #{tpu_custom_call.1} parent=1 // pred_check_branch
      %41 = sbr.rel (0) target = $region13
    $region12: #{tpu_custom_call.1} parent=1 // pred_region
      %43 = vsyncadd [#allocation6], 0
      %s44 = sshll.u32 %s2, 4
      %s45 = int_to_ptr.hbm [resolvable:$true] %s44
      %s46 = sshll.u32 [#allocation7], 4
      %s47 = int_to_ptr.vmem [resolvable:$true] %s46
      %52 = dma.hbm_to_vmem [thread:$0]  %s45, 1024, %s47, [#allocation6], 64, 64, 4
    $region13: #{tpu_custom_call.1} parent=1 // pred_fallthru
      _
    // Predicated region
    $region14: #{tpu_custom_call.1} parent=1 // pred_check
      _
    $region15: #{tpu_custom_call.1} parent=1 // pred_check_branch
      %54 = sbr.rel (0) target = $region17
    $region16: #{tpu_custom_call.1} parent=1 // pred_region
      %56 = vsyncadd [#allocation9], 0
      %s57 = sshll.u32 %s3, 4
      %s58 = int_to_ptr.hbm [resolvable:$true] %s57
      %s59 = sshll.u32 [#allocation8], 4
      %s60 = int_to_ptr.vmem [resolvable:$true] %s59
      %65 = dma.hbm_to_vmem [thread:$0]  %s58, 1024, %s60, [#allocation9], 64, 64, 4
    $region17: #{tpu_custom_call.1} parent=1 // pred_fallthru
      _
    // Predicated region
    $region18: #{tpu_custom_call.1} parent=1 // pred_check
      _
    $region19: #{tpu_custom_call.1} parent=1 // pred_check_branch
      %67 = sbr.rel (0) target = $region21
    $region20: #{tpu_custom_call.1} parent=1 // pred_region
      _
    $region21: #{tpu_custom_call.1} parent=1 // pred_fallthru
      _
    // Predicated region
    $region22: #{tpu_custom_call.1} parent=1 // pred_check
      _
    $region23: #{tpu_custom_call.1} parent=1 // pred_check_branch
      %69 = sbr.rel (0) target = $region25
    $region24: #{tpu_custom_call.1} parent=1 // pred_region
      _
    $region25: #{tpu_custom_call.1} parent=1 // pred_fallthru
      _
    // Predicated region
    $region26: #{tpu_custom_call.1} parent=1 // pred_check
      _
    $region27: #{tpu_custom_call.1} parent=1 // pred_check_branch
      %71 = sbr.rel (0) target = $region29
    $region28: #{tpu_custom_call.1} parent=1 // pred_region
      _
    $region29: #{tpu_custom_call.1} parent=1 // pred_fallthru
      _
    // Predicated region
    $region30: #{tpu_custom_call.1} parent=1 // pred_check
      _
    $region31: #{tpu_custom_call.1} parent=1 // pred_check_branch
      %73 = sbr.rel (0) target = $region33
    $region32: #{tpu_custom_call.1} parent=1 // pred_region
      %75 = dma.done [#allocation3], 128
    $region33: #{tpu_custom_call.1} parent=1 // pred_fallthru
      _
    // Predicated region
    $region34: #{tpu_custom_call.1} parent=1 // pred_check
      _
    $region35: #{tpu_custom_call.1} parent=1 // pred_check_branch
      %77 = sbr.rel (0) target = $region37
    $region36: #{tpu_custom_call.1} parent=1 // pred_region
      %79 = dma.done [#allocation6], 128
    $region37: #{tpu_custom_call.1} parent=1 // pred_fallthru
      _
    // Predicated region
    $region38: #{tpu_custom_call.1} parent=1 // pred_check
      _
    $region39: #{tpu_custom_call.1} parent=1 // pred_check_branch
      %81 = sbr.rel (0) target = $region41
    $region40: #{tpu_custom_call.1} parent=1 // pred_region
      %83 = dma.done [#allocation6], 1024
    $region41: #{tpu_custom_call.1} parent=1 // pred_fallthru
      _
    // Predicated region
    $region42: #{tpu_custom_call.1} parent=1 // pred_check
      _
    $region43: #{tpu_custom_call.1} parent=1 // pred_check_branch
      %85 = sbr.rel (0) target = $region45
    $region44: #{tpu_custom_call.1} parent=1 // pred_region
      %87 = dma.done [#allocation9], 1024
    $region45: #{tpu_custom_call.1} parent=1 // pred_fallthru
      _
    %v89 = vld [vmem:[#allocation2] sm:$0xff]
    %v90 = vpack.c.bf16 %v89, %v89
    %v91 = vld [vmem:[#allocation5] sm:$0xf]
    %v92 = vld [vmem:[#allocation5 + $0x4] sm:$0xf]
    %v93 = vld [vmem:[%s4] sm:$0x1]
    %v95 = vperm.slane %v93, 0
    %v99 = vunpack.c.l.b16 %v91
    %v100 = vunpack.c.l.b16 %v92
    %v101 = vpack.c.b16 %v100, %v99
    %vm103 = vcmask 130048
    %v105 = vsel %vm103, %v90, 0
    %107 = vmatpush.bf16.msra.mxu0 0
    %108 = vmatpush.bf16.msra.mxu0 0
    %109 = vmatpush.bf16.msra.mxu0 0
    %110 = vmatpush.bf16.msra.mxu0 0
    %111 = vmatpush.bf16.msra.mxu0 0
    %112 = vmatpush.bf16.msra.mxu0 0
    %113 = vmatpush.bf16.msra.mxu0 0
    %114 = vmatpush.bf16.msra.mxu0 %v101
    %115 = vmatmul.bf16.gmra.mxu0 %v105
    %v116 = vpop.f32.mrf.mxu0
    %v117 = vadd.f32 %v95, %v116
    %v118 = vpop.f32.mrf.mxu0
    %119 = vdwg.mxu0
    %v120 = vmax.f32 %v117, 0.0
    %v121 = vpack.c.bf16 %v120, %v120
    %v122 = vld [vmem:[#allocation7] sm:$0xf]
    %v123 = vld [vmem:[#allocation7 + $0x4] sm:$0xf]
    %v124 = vld [vmem:[#allocation7 + $0x8] sm:$0xf]
    %v125 = vld [vmem:[#allocation7 + $0xc] sm:$0xf]
    %v126 = vld [vmem:[#allocation7 + $0x10] sm:$0xf]
    %v127 = vld [vmem:[#allocation7 + $0x14] sm:$0xf]
    %v128 = vld [vmem:[#allocation7 + $0x18] sm:$0xf]
    %v129 = vld [vmem:[#allocation7 + $0x1c] sm:$0xf]
    %v130 = vld [vmem:[#allocation7 + $0x20] sm:$0xf]
    %v131 = vld [vmem:[#allocation7 + $0x24] sm:$0xf]
    %v132 = vld [vmem:[#allocation7 + $0x28] sm:$0xf]
    %v133 = vld [vmem:[#allocation7 + $0x2c] sm:$0xf]
    %v134 = vld [vmem:[#allocation7 + $0x30] sm:$0xf]
    %v135 = vld [vmem:[#allocation7 + $0x34] sm:$0xf]
    %v136 = vld [vmem:[#allocation7 + $0x38] sm:$0xf]
    %v137 = vld [vmem:[#allocation7 + $0x3c] sm:$0xf]
    %v138 = vld [vmem:[%s5] sm:$0x1]
    %v140 = vperm.slane %v138, 0
    %v158 = vunpack.c.l.b16 %v122
    %v159 = vunpack.c.l.b16 %v123
    %v160 = vunpack.c.l.b16 %v124
    %v161 = vunpack.c.l.b16 %v125
    %v162 = vunpack.c.l.b16 %v126
    %v163 = vunpack.c.l.b16 %v127
    %v164 = vunpack.c.l.b16 %v128
    %v165 = vunpack.c.l.b16 %v129
    %v166 = vunpack.c.l.b16 %v130
    %v167 = vunpack.c.l.b16 %v131
    %v168 = vunpack.c.l.b16 %v132
    %v169 = vunpack.c.l.b16 %v133
    %v170 = vunpack.c.l.b16 %v134
    %v171 = vunpack.c.l.b16 %v135
    %v172 = vunpack.c.l.b16 %v136
    %v173 = vunpack.c.l.b16 %v137
    %v174 = vpack.c.b16 %v159, %v158
    %v175 = vpack.c.b16 %v161, %v160
    %v176 = vpack.c.b16 %v163, %v162
    %v177 = vpack.c.b16 %v165, %v164
    %v178 = vpack.c.b16 %v167, %v166
    %v179 = vpack.c.b16 %v169, %v168
    %v180 = vpack.c.b16 %v171, %v170
    %v181 = vpack.c.b16 %v173, %v172
    %190 = vmatpush.bf16.msra.mxu0 %v181
    %191 = vmatpush.bf16.msra.mxu0 %v180
    %192 = vmatpush.bf16.msra.mxu0 %v179
    %193 = vmatpush.bf16.msra.mxu0 %v178
    %194 = vmatpush.bf16.msra.mxu0 %v177
    %195 = vmatpush.bf16.msra.mxu0 %v176
    %196 = vmatpush.bf16.msra.mxu0 %v175
    %197 = vmatpush.bf16.msra.mxu0 %v174
    %198 = vmatmul.bf16.gmra.mxu0 %v121
    %v199 = vpop.f32.mrf.mxu0
    %v200 = vadd.f32 %v140, %v199
    %v201 = vpop.f32.mrf.mxu0
    %202 = vdwg.mxu0
    %v203 = vmax.f32 %v200, 0.0
    %v204 = vpack.c.bf16 %v203, %v203
    %v205 = vld [vmem:[#allocation8] sm:$0xf]
    %v206 = vld [vmem:[#allocation8 + $0x4] sm:$0xf]
    %v207 = vld [vmem:[#allocation8 + $0x8] sm:$0xf]
    %v208 = vld [vmem:[#allocation8 + $0xc] sm:$0xf]
    %v209 = vld [vmem:[#allocation8 + $0x10] sm:$0xf]
    %v210 = vld [vmem:[#allocation8 + $0x14] sm:$0xf]
    %v211 = vld [vmem:[#allocation8 + $0x18] sm:$0xf]
    %v212 = vld [vmem:[#allocation8 + $0x1c] sm:$0xf]
    %v213 = vld [vmem:[#allocation8 + $0x20] sm:$0xf]
    %v214 = vld [vmem:[#allocation8 + $0x24] sm:$0xf]
    %v215 = vld [vmem:[#allocation8 + $0x28] sm:$0xf]
    %v216 = vld [vmem:[#allocation8 + $0x2c] sm:$0xf]
    %v217 = vld [vmem:[#allocation8 + $0x30] sm:$0xf]
    %v218 = vld [vmem:[#allocation8 + $0x34] sm:$0xf]
    %v219 = vld [vmem:[#allocation8 + $0x38] sm:$0xf]
    %v220 = vld [vmem:[#allocation8 + $0x3c] sm:$0xf]
    %v221 = vld [vmem:[%s6] sm:$0x1]
    %v223 = vperm.slane %v221, 0
    %v241 = vunpack.c.l.b16 %v205
    %v242 = vunpack.c.l.b16 %v206
    %v243 = vunpack.c.l.b16 %v207
    %v244 = vunpack.c.l.b16 %v208
    %v245 = vunpack.c.l.b16 %v209
    %v246 = vunpack.c.l.b16 %v210
    %v247 = vunpack.c.l.b16 %v211
    %v248 = vunpack.c.l.b16 %v212
    %v249 = vunpack.c.l.b16 %v213
    %v250 = vunpack.c.l.b16 %v214
    %v251 = vunpack.c.l.b16 %v215
    %v252 = vunpack.c.l.b16 %v216
    %v253 = vunpack.c.l.b16 %v217
    %v254 = vunpack.c.l.b16 %v218
    %v255 = vunpack.c.l.b16 %v219
    %v256 = vunpack.c.l.b16 %v220
    %v257 = vpack.c.b16 %v242, %v241
    %v258 = vpack.c.b16 %v244, %v243
    %v259 = vpack.c.b16 %v246, %v245
    %v260 = vpack.c.b16 %v248, %v247
    %v261 = vpack.c.b16 %v250, %v249
    %v262 = vpack.c.b16 %v252, %v251
    %v263 = vpack.c.b16 %v254, %v253
    %v264 = vpack.c.b16 %v256, %v255
    %273 = vmatpush.bf16.msra.mxu0 %v264
    %274 = vmatpush.bf16.msra.mxu0 %v263
    %275 = vmatpush.bf16.msra.mxu0 %v262
    %276 = vmatpush.bf16.msra.mxu0 %v261
    %277 = vmatpush.bf16.msra.mxu0 %v260
    %278 = vmatpush.bf16.msra.mxu0 %v259
    %279 = vmatpush.bf16.msra.mxu0 %v258
    %280 = vmatpush.bf16.msra.mxu0 %v257
    %281 = vmatmul.bf16.gmra.mxu0 %v204
    %v282 = vpop.f32.mrf.mxu0
    %v283 = vadd.f32 %v223, %v282
    %v284 = vpop.f32.mrf.mxu0
    %285 = vdwg.mxu0
    %v286 = vadd.f32 %v120, %v283
    %287 = vst [vmem:[#allocation10] sm:$0xff] %v286
    // Predicated region
    $region46: #{tpu_custom_call.1} parent=1 // pred_check
      _
    $region47: #{tpu_custom_call.1} parent=1 // pred_check_branch
      %289 = sbr.rel (0) target = $region49
    $region48: #{tpu_custom_call.1} parent=1 // pred_region
      %291 = vsyncadd [#allocation4], 0
      %s293 = sshll.u32 [#allocation10], 4
      %s294 = int_to_ptr.vmem [resolvable:$true] %s293
      %s295 = sshll.u32 %s7, 4
      %s296 = int_to_ptr.hbm [resolvable:$true] %s295
      %298 = dma.vmem_to_hbm [thread:$0]  %s294, 128, %s296, [#allocation4]
    $region49: #{tpu_custom_call.1} parent=1 // pred_fallthru
      _
    // Predicated region
    $region50: #{tpu_custom_call.1} parent=1 // pred_check
      _
    $region51: #{tpu_custom_call.1} parent=1 // pred_check_branch
      %300 = sbr.rel (0) target = $region53
    $region52: #{tpu_custom_call.1} parent=1 // pred_region
      %302 = dma.done [#allocation4], 128
    $region53: #{tpu_custom_call.1} parent=1 // pred_fallthru
      _
    %303 = vsyncpa [#allocation3], 1
    %304 = vsyncpa [#allocation6], 1
    %305 = vsyncpa [#allocation9], 1
    %306 = vsyncpa [#allocation4], 1

</llo_original>
